<compile_context>
chip_gen: v5e
topology: v5e:2x2
jax: 0.10.0
libtpu: 0.0.40
codegen_flags: <defaults>
</compile_context>

<pallas_src>
from functools import partial

import jax
import jax.numpy as jnp
from jax import lax
from jax.experimental import pallas as pl
from jax.experimental.pallas import tpu as pltpu

# Synthetic constants (CONST.* is not available); tic-tac-toe-like sizes.
NN_INPUT_SIZE = 18
NN_ACTION_SIZE = 9
HIDDEN1 = 54
HIDDEN2 = 54
HIDDEN3 = 27
NUM_LAYERS = 4


def _cdiv(a, b):
    return -(-a // b)


def _round_up(n, m):
    return _cdiv(n, m) * m


def _mlp_kernel(x_ref, w1_ref, w2_ref, w3_ref, w4_ref, b_ref, o_ref):
    """One batch tile, lane-dense compute.

    x_ref : (TB, NN_INPUT_SIZE)   natural PyTorch layout (batch on sublanes)
    wN_ref: (out_features, in_features)   PyTorch nn.Linear layout
    b_ref : (HIDDEN1, NUM_LAYERS) f32, column j = bias of layer j+1, zero padded
    o_ref : (NN_ACTION_SIZE, TB)  batch on lanes (lane-dense stores)
    """
    x = x_ref[...]
    b = b_ref[...]
    dt = w1_ref.dtype

    # Layer 1 absorbs the batch transpose: contract in_features of W1 (dim 1)
    # with in_features of x (dim 1)  ->  (HIDDEN1, TB), feature-major.
    h = lax.dot_general(w1_ref[...], x, (((1,), (1,)), ((), ())),
                        preferred_element_type=jnp.float32)
    h = jnp.maximum(h + b[:HIDDEN1, 0:1], 0.0)

    h = jnp.dot(w2_ref[...], h.astype(dt), preferred_element_type=jnp.float32)
    h = jnp.maximum(h + b[:HIDDEN2, 1:2], 0.0)

    h = jnp.dot(w3_ref[...], h.astype(dt), preferred_element_type=jnp.float32)
    h = jnp.maximum(h + b[:HIDDEN3, 2:3], 0.0)

    h = jnp.dot(w4_ref[...], h.astype(dt), preferred_element_type=jnp.float32)
    o_ref[...] = jnp.tanh(h + b[:NN_ACTION_SIZE, 3:4])


def _pack_biases(params):
    """Pack the four bias vectors into one (HIDDEN1, 4) f32 resident block."""
    b = jnp.zeros((HIDDEN1, NUM_LAYERS), dtype=jnp.float32)
    b = b.at[:HIDDEN1, 0].set(params["b1"].astype(jnp.float32))
    b = b.at[:HIDDEN2, 1].set(params["b2"].astype(jnp.float32))
    b = b.at[:HIDDEN3, 2].set(params["b3"].astype(jnp.float32))
    b = b.at[:NN_ACTION_SIZE, 3].set(params["b4"].astype(jnp.float32))
    return b


@partial(jax.jit, static_argnames=("batch_tile", "min_grid_steps",
                                   "compute_dtype", "lane_major_output"))
def network_forward(x, params, *, batch_tile=1024, min_grid_steps=1,
                    compute_dtype=jnp.float32, lane_major_output=False):
    """Forward pass of the Q-network.

    x: (B, NN_INPUT_SIZE) float array.
    params: w1..w4 in PyTorch (out, in) layout, b1..b4 as (out,) vectors.
    Returns (B, NN_ACTION_SIZE) Q-values in [-1, 1]
    (or (NN_ACTION_SIZE, B) lane-dense when lane_major_output=True).

    batch_tile     : target lane-tile (rounded up to a multiple of 128).
    min_grid_steps : set to 2 on v7x so the 'parallel' axis uses both TCs even
                     for small batches.
    compute_dtype  : jnp.float32 (exact) or jnp.bfloat16 (halves x/weight HBM
                     traffic; accumulation and activations stay f32).
    """
    B = x.shape[0]

    # --- balanced 128-multiple batch tiling (padding per call < ~128 lanes) ---
    if B < 128:
        tb, n_steps = B, 1                      # single exact-fit block
    else:
        batch_tile = max(128, _round_up(int(batch_tile), 128))
        b128 = _round_up(B, 128)
        n_steps = _cdiv(b128, batch_tile)
        n_steps = max(n_steps, int(min_grid_steps))
        n_steps = min(n_steps, b128 // 128)     # never create fully-empty steps
        tb = _round_up(_cdiv(b128, n_steps), 128)

    cd = compute_dtype
    xq = x.astype(cd)                           # no-op for f32 callers
    w1 = params["w1"].astype(cd)
    w2 = params["w2"].astype(cd)
    w3 = params["w3"].astype(cd)
    w4 = params["w4"].astype(cd)
    b_all = _pack_biases(params)                # always f32

    full = lambda i: (0, 0)                     # resident weight / bias blocks

    out_t = pl.pallas_call(
        _mlp_kernel,
        out_shape=jax.ShapeDtypeStruct((NN_ACTION_SIZE, B), jnp.float32),
        grid=(n_steps,),
        in_specs=[
            pl.BlockSpec((tb, NN_INPUT_SIZE), lambda i: (i, 0)),   # streamed x
            pl.BlockSpec((HIDDEN1, NN_INPUT_SIZE), full),
            pl.BlockSpec((HIDDEN2, HIDDEN1), full),
            pl.BlockSpec((HIDDEN3, HIDDEN2), full),
            pl.BlockSpec((NN_ACTION_SIZE, HIDDEN3), full),
            pl.BlockSpec((HIDDEN1, NUM_LAYERS), full),
        ],
        out_specs=pl.BlockSpec((NN_ACTION_SIZE, tb), lambda i: (0, i)),
        compiler_params=pltpu.CompilerParams(
            dimension_semantics=("parallel",)),
    )(xq, w1, w2, w3, w4, b_all)

    if lane_major_output:
        return out_t                            # (NN_ACTION_SIZE, B), lane-dense
    # Tiny (9 x B) transpose to match the PyTorch (B, 9) output layout.
    return out_t.T


def init_params(key):
    """Mirror the PyTorch module init: weights ~ Normal(0, 0.2); biases keep
    nn.Linear's default Uniform(-1/sqrt(fan_in), 1/sqrt(fan_in))."""
    sizes = [(NN_INPUT_SIZE, HIDDEN1),
             (HIDDEN1, HIDDEN2),
             (HIDDEN2, HIDDEN3),
             (HIDDEN3, NN_ACTION_SIZE)]
    params = {}
    for i, (fan_in, fan_out) in enumerate(sizes, start=1):
        key, kw, kb = jax.random.split(key, 3)
        # PyTorch layout: (out_features, in_features)
        params[f"w{i}"] = 0.2 * jax.random.normal(
            kw, (fan_out, fan_in), dtype=jnp.float32)
        bound = 1.0 / (fan_in ** 0.5)
        params[f"b{i}"] = jax.random.uniform(
            kb, (fan_out,), minval=-bound, maxval=bound, dtype=jnp.float32)
    return params


def _reference_forward(x, params):
    hp = lax.Precision.HIGHEST
    h = jnp.maximum(jnp.dot(x, params["w1"].T, precision=hp) + params["b1"], 0.0)
    h = jnp.maximum(jnp.dot(h, params["w2"].T, precision=hp) + params["b2"], 0.0)
    h = jnp.maximum(jnp.dot(h, params["w3"].T, precision=hp) + params["b3"], 0.0)
    return jnp.tanh(jnp.dot(h, params["w4"].T, precision=hp) + params["b4"])

# TODO(synk): train_step (SGD + MSE on the selected action) is host-side
# training logic and is intentionally not implemented as a kernel.


if __name__ == "__main__":
    key = jax.random.PRNGKey(0)
    key, kx = jax.random.split(key)
    params = init_params(key)

    # Main check: B=384 -> balanced single tile (tb=384), no padded lanes.
    batch = 384
    x = jax.random.normal(kx, (batch, NN_INPUT_SIZE), dtype=jnp.float32)
    ref = _reference_forward(x, params)

    out = jax.block_until_ready(network_forward(x, params))
    assert out.shape == (batch, NN_ACTION_SIZE)
    assert jnp.allclose(out, ref, atol=1e-2, rtol=1e-2)

    # Multi-step grid + ragged last tile (B=300, tb=128, grid=(3,)).
    x_r = x[:300]
    out_r = jax.block_until_ready(network_forward(x_r, params, batch_tile=128))
    assert out_r.shape == (300, NN_ACTION_SIZE)
    assert jnp.allclose(out_r, ref[:300], atol=1e-2, rtol=1e-2)

    # Tiny batch (single exact-fit block).
    out_s = jax.block_until_ready(network_forward(x[:8], params))
    assert out_s.shape == (8, NN_ACTION_SIZE)
    assert jnp.allclose(out_s, ref[:8], atol=1e-2, rtol=1e-2)

    # Lane-major output path (no wrapper transpose at all).
    out_lm = jax.block_until_ready(
        network_forward(x, params, lane_major_output=True))
    assert out_lm.shape == (NN_ACTION_SIZE, batch)
    assert jnp.allclose(out_lm.T, ref, atol=1e-2, rtol=1e-2)

    # bf16 x/weights at the HBM boundary, f32 accumulation (large-batch regime).
    out_bf = jax.block_until_ready(
        network_forward(x, params, compute_dtype=jnp.bfloat16))
    assert jnp.allclose(out_bf, ref, atol=5e-2, rtol=5e-2)

    print("KERNEL_OK")
</pallas_src>

<mosaic_0001>
module attributes {stable_mosaic.version = 11 : i64} {
  func.func @_mlp_kernel(%arg0: i32, %arg1: memref<384x18xf32, #tpu.memory_space<vmem>>, %arg2: memref<54x18xf32, #tpu.memory_space<vmem>>, %arg3: memref<54x54xf32, #tpu.memory_space<vmem>>, %arg4: memref<27x54xf32, #tpu.memory_space<vmem>>, %arg5: memref<9x27xf32, #tpu.memory_space<vmem>>, %arg6: memref<54x4xf32, #tpu.memory_space<vmem>>, %arg7: memref<9x384xf32, #tpu.memory_space<vmem>>) attributes {dimension_semantics = [#tpu.dimension_semantics<parallel>], iteration_bounds = array<i64: 1>, scalar_prefetch = 0 : i64, scratch_operands = 0 : i64, tpu.core_type = #tpu.core_type<tc>, window_params = [{transform_indices = @transform_0, window_bounds = array<i64: 384, 18>}, {pipeline_mode = #tpu.pipeline_mode<synchronous>, transform_indices = @transform_1, window_bounds = array<i64: 54, 18>}, {pipeline_mode = #tpu.pipeline_mode<synchronous>, transform_indices = @transform_2, window_bounds = array<i64: 54, 54>}, {pipeline_mode = #tpu.pipeline_mode<synchronous>, transform_indices = @transform_3, window_bounds = array<i64: 27, 54>}, {pipeline_mode = #tpu.pipeline_mode<synchronous>, transform_indices = @transform_4, window_bounds = array<i64: 9, 27>}, {pipeline_mode = #tpu.pipeline_mode<synchronous>, transform_indices = @transform_5, window_bounds = array<i64: 54, 4>}, {transform_indices = @transform_6, window_bounds = array<i64: 9, 384>}]} {
    %c0 = arith.constant 0 : index
    %c0_0 = arith.constant 0 : index
    %0 = vector.load %arg1[%c0, %c0_0] : memref<384x18xf32, #tpu.memory_space<vmem>>, vector<384x18xf32>
    %c0_1 = arith.constant 0 : index
    %c0_2 = arith.constant 0 : index
    %1 = vector.load %arg6[%c0_1, %c0_2] : memref<54x4xf32, #tpu.memory_space<vmem>>, vector<54x4xf32>
    %c0_3 = arith.constant 0 : index
    %c0_4 = arith.constant 0 : index
    %2 = vector.load %arg2[%c0_3, %c0_4] : memref<54x18xf32, #tpu.memory_space<vmem>>, vector<54x18xf32>
    %cst = arith.constant dense<0.000000e+00> : vector<54x384xf32>
    %3 = tpu.matmul %2, %0, %cst {dimension_numbers = #tpu.dot_dimension_numbers<[1], [1], [0], [0], [0, 0, 1, 0], [], []>} : vector<54x18xf32>, vector<384x18xf32>, vector<54x384xf32> -> vector<54x384xf32>
    %4 = vector.extract_strided_slice %1 {offsets = [0, 0], sizes = [54, 1], strides = [1, 1]} : vector<54x4xf32> to vector<54x1xf32>
    %5 = vector.broadcast %4 : vector<54x1xf32> to vector<54x384xf32>
    %6 = arith.addf %3, %5 : vector<54x384xf32>
    %cst_5 = arith.constant 0.000000e+00 : f32
    %7 = vector.broadcast %cst_5 : f32 to vector<54x384xf32>
    %8 = arith.maximumf %6, %7 : vector<54x384xf32>
    %c0_6 = arith.constant 0 : index
    %c0_7 = arith.constant 0 : index
    %9 = vector.load %arg3[%c0_6, %c0_7] : memref<54x54xf32, #tpu.memory_space<vmem>>, vector<54x54xf32>
    %cst_8 = arith.constant dense<0.000000e+00> : vector<54x384xf32>
    %10 = tpu.matmul %9, %8, %cst_8 {dimension_numbers = #tpu.dot_dimension_numbers<[1], [0], [0], [1], [0, 0, 1, 1], [], []>} : vector<54x54xf32>, vector<54x384xf32>, vector<54x384xf32> -> vector<54x384xf32>
    %11 = vector.extract_strided_slice %1 {offsets = [0, 1], sizes = [54, 1], strides = [1, 1]} : vector<54x4xf32> to vector<54x1xf32>
    %12 = vector.broadcast %11 : vector<54x1xf32> to vector<54x384xf32>
    %13 = arith.addf %10, %12 : vector<54x384xf32>
    %cst_9 = arith.constant 0.000000e+00 : f32
    %14 = vector.broadcast %cst_9 : f32 to vector<54x384xf32>
    %15 = arith.maximumf %13, %14 : vector<54x384xf32>
    %c0_10 = arith.constant 0 : index
    %c0_11 = arith.constant 0 : index
    %16 = vector.load %arg4[%c0_10, %c0_11] : memref<27x54xf32, #tpu.memory_space<vmem>>, vector<27x54xf32>
    %cst_12 = arith.constant dense<0.000000e+00> : vector<27x384xf32>
    %17 = tpu.matmul %16, %15, %cst_12 {dimension_numbers = #tpu.dot_dimension_numbers<[1], [0], [0], [1], [0, 0, 1, 1], [], []>} : vector<27x54xf32>, vector<54x384xf32>, vector<27x384xf32> -> vector<27x384xf32>
    %18 = vector.extract_strided_slice %1 {offsets = [0, 2], sizes = [27, 1], strides = [1, 1]} : vector<54x4xf32> to vector<27x1xf32>
    %19 = vector.broadcast %18 : vector<27x1xf32> to vector<27x384xf32>
    %20 = arith.addf %17, %19 : vector<27x384xf32>
    %cst_13 = arith.constant 0.000000e+00 : f32
    %21 = vector.broadcast %cst_13 : f32 to vector<27x384xf32>
    %22 = arith.maximumf %20, %21 : vector<27x384xf32>
    %c0_14 = arith.constant 0 : index
    %c0_15 = arith.constant 0 : index
    %23 = vector.load %arg5[%c0_14, %c0_15] : memref<9x27xf32, #tpu.memory_space<vmem>>, vector<9x27xf32>
    %cst_16 = arith.constant dense<0.000000e+00> : vector<9x384xf32>
    %24 = tpu.matmul %23, %22, %cst_16 {dimension_numbers = #tpu.dot_dimension_numbers<[1], [0], [0], [1], [0, 0, 1, 1], [], []>} : vector<9x27xf32>, vector<27x384xf32>, vector<9x384xf32> -> vector<9x384xf32>
    %25 = vector.extract_strided_slice %1 {offsets = [0, 3], sizes = [9, 1], strides = [1, 1]} : vector<54x4xf32> to vector<9x1xf32>
    %26 = vector.broadcast %25 : vector<9x1xf32> to vector<9x384xf32>
    %27 = arith.addf %24, %26 : vector<9x384xf32>
    %28 = math.tanh %27 : vector<9x384xf32>
    %c0_17 = arith.constant 0 : index
    %c0_18 = arith.constant 0 : index
    %29 = vector.load %arg7[%c0_17, %c0_18] : memref<9x384xf32, #tpu.memory_space<vmem>>, vector<9x384xf32>
    tpu.vector_store %arg7[%c0_17, %c0_18], %28 {strides = array<i32>} : memref<9x384xf32, #tpu.memory_space<vmem>>, vector<9x384xf32>,
    return
  }
  func.func @transform_0(%arg0: i32) -> (i32, i32) {
    %c0_i32 = arith.constant 0 : i32
    %c0_i32_0 = arith.constant 0 : i32
    return %arg0, %c0_i32 : i32, i32
  }
  func.func @transform_1(%arg0: i32) -> (i32, i32) {
    %c0_i32 = arith.constant 0 : i32
    %c0_i32_0 = arith.constant 0 : i32
    %c0_i32_1 = arith.constant 0 : i32
    return %c0_i32, %c0_i32_0 : i32, i32
  }
  func.func @transform_2(%arg0: i32) -> (i32, i32) {
    %c0_i32 = arith.constant 0 : i32
    %c0_i32_0 = arith.constant 0 : i32
    %c0_i32_1 = arith.constant 0 : i32
    return %c0_i32, %c0_i32_0 : i32, i32
  }
  func.func @transform_3(%arg0: i32) -> (i32, i32) {
    %c0_i32 = arith.constant 0 : i32
    %c0_i32_0 = arith.constant 0 : i32
    %c0_i32_1 = arith.constant 0 : i32
    return %c0_i32, %c0_i32_0 : i32, i32
  }
  func.func @transform_4(%arg0: i32) -> (i32, i32) {
    %c0_i32 = arith.constant 0 : i32
    %c0_i32_0 = arith.constant 0 : i32
    %c0_i32_1 = arith.constant 0 : i32
    return %c0_i32, %c0_i32_0 : i32, i32
  }
  func.func @transform_5(%arg0: i32) -> (i32, i32) {
    %c0_i32 = arith.constant 0 : i32
    %c0_i32_0 = arith.constant 0 : i32
    %c0_i32_1 = arith.constant 0 : i32
    return %c0_i32, %c0_i32_0 : i32, i32
  }
  func.func @transform_6(%arg0: i32) -> (i32, i32) {
    %c0_i32 = arith.constant 0 : i32
    %c0_i32_0 = arith.constant 0 : i32
    return %c0_i32, %arg0 : i32, i32
  }
}

</mosaic_0001>

<llo_original>
// kernel: network_forward.1
$region0: #{network_forward.1}
  #allocation0 [shape = 'u32[]', space=smem, size = 0x4, offset = 0x4, fixed_abs, tag = 'smem constant byte address 0x4 - core index']
  #allocation1 [shape = 'u32[72,128]{1,0:T(1,128)}', space=vmem, size = 0x9000, scoped, tag = 'internal scratch']
  %s0 = inlined_call_operand.vmem [shape: f32[384,18], index: 0, kind: input, shape index: {}]
  %s1 = inlined_call_operand.vmem [shape: f32[54,18], index: 1, kind: input, shape index: {}]
  %s2 = inlined_call_operand.vmem [shape: f32[54,54], index: 2, kind: input, shape index: {}]
  %s3 = inlined_call_operand.vmem [shape: f32[27,54], index: 3, kind: input, shape index: {}]
  %s4 = inlined_call_operand.vmem [shape: f32[9,27], index: 4, kind: input, shape index: {}]
  %s5 = inlined_call_operand.vmem [shape: f32[54,4], index: 5, kind: input, shape index: {}]
  %s6 = inlined_call_operand.hbm [shape: f32[9,384], index: 6, kind: output, shape index: {}]
  %s7 = sld [smem:[#allocation0]]
  $region34: #{network_forward.1} parent=0
    _
  %s9 = ssub.s32 1, %s7
  %s10 = scalar_select 0, %s9, %s7
  $region1: #{network_forward.1} parent=0
    #allocation2 [shape = 'u8[24576]{0}', space=vmem, size = 0x6000, scoped, tag = 'output window, operand 0, single buffered']
    #allocation3 [shape = 's32[1]{0}', space=sflag, size = 0x4, scoped, tag = 'scoped memory for network_forward.1']
    %11 = vsyncpa [#allocation3], 0
    // Predicated region
    $region2: #{network_forward.1} parent=1 // pred_check
      _
    $region3: #{network_forward.1} parent=1 // pred_check_branch
      %13 = sbr.rel (0) target = $region5
    $region4: #{network_forward.1} parent=1 // pred_region
      _
    $region5: #{network_forward.1} parent=1 // pred_fallthru
      _
    // Predicated region
    $region6: #{network_forward.1} parent=1 // pred_check
      _
    $region7: #{network_forward.1} parent=1 // pred_check_branch
      %15 = sbr.rel (0) target = $region9
    $region8: #{network_forward.1} parent=1 // pred_region
      _
    $region9: #{network_forward.1} parent=1 // pred_fallthru
      _
    // Predicated region
    $region10: #{network_forward.1} parent=1 // pred_check
      _
    $region11: #{network_forward.1} parent=1 // pred_check_branch
      %17 = sbr.rel (0) target = $region13
    $region12: #{network_forward.1} parent=1 // pred_region
      _
    $region13: #{network_forward.1} parent=1 // pred_fallthru
      _
    // Predicated region
    $region14: #{network_forward.1} parent=1 // pred_check
      _
    $region15: #{network_forward.1} parent=1 // pred_check_branch
      %19 = sbr.rel (0) target = $region17
    $region16: #{network_forward.1} parent=1 // pred_region
      _
    $region17: #{network_forward.1} parent=1 // pred_fallthru
      _
    // Predicated region
    $region18: #{network_forward.1} parent=1 // pred_check
      _
    $region19: #{network_forward.1} parent=1 // pred_check_branch
      %21 = sbr.rel (0) target = $region21
    $region20: #{network_forward.1} parent=1 // pred_region
      _
    $region21: #{network_forward.1} parent=1 // pred_fallthru
      _
    // Predicated region
    $region22: #{network_forward.1} parent=1 // pred_check
      _
    $region23: #{network_forward.1} parent=1 // pred_check_branch
      %23 = sbr.rel (0) target = $region25
    $region24: #{network_forward.1} parent=1 // pred_region
      _
    $region25: #{network_forward.1} parent=1 // pred_fallthru
      _
    %v24 = vld [vmem:[%s0] sm:$0xff]
    %v25 = vld [vmem:[%s0 + $0x8] sm:$0xff]
    %v26 = vld [vmem:[%s0 + $0x10] sm:$0xff]
    %v27 = vld [vmem:[%s0 + $0x18] sm:$0xff]
    %v28 = vld [vmem:[%s0 + $0x20] sm:$0xff]
    %v29 = vld [vmem:[%s0 + $0x28] sm:$0xff]
    %v30 = vld [vmem:[%s0 + $0x30] sm:$0xff]
    %v31 = vld [vmem:[%s0 + $0x38] sm:$0xff]
    %v32 = vld [vmem:[%s0 + $0x40] sm:$0xff]
    %v33 = vld [vmem:[%s0 + $0x48] sm:$0xff]
    %v34 = vld [vmem:[%s0 + $0x50] sm:$0xff]
    %v35 = vld [vmem:[%s0 + $0x58] sm:$0xff]
    %v36 = vld [vmem:[%s0 + $0x60] sm:$0xff]
    %v37 = vld [vmem:[%s0 + $0x68] sm:$0xff]
    %v38 = vld [vmem:[%s0 + $0x70] sm:$0xff]
    %v39 = vld [vmem:[%s0 + $0x78] sm:$0xff]
    %v40 = vld [vmem:[%s0 + $0x80] sm:$0xff]
    %v41 = vld [vmem:[%s0 + $0x88] sm:$0xff]
    %v42 = vld [vmem:[%s0 + $0x90] sm:$0xff]
    %v43 = vld [vmem:[%s0 + $0x98] sm:$0xff]
    %v44 = vld [vmem:[%s0 + $0xa0] sm:$0xff]
    %v45 = vld [vmem:[%s0 + $0xa8] sm:$0xff]
    %v46 = vld [vmem:[%s0 + $0xb0] sm:$0xff]
    %v47 = vld [vmem:[%s0 + $0xb8] sm:$0xff]
    %v48 = vld [vmem:[%s0 + $0xc0] sm:$0xff]
    %v49 = vld [vmem:[%s0 + $0xc8] sm:$0xff]
    %v50 = vld [vmem:[%s0 + $0xd0] sm:$0xff]
    %v51 = vld [vmem:[%s0 + $0xd8] sm:$0xff]
    %v52 = vld [vmem:[%s0 + $0xe0] sm:$0xff]
    %v53 = vld [vmem:[%s0 + $0xe8] sm:$0xff]
    %v54 = vld [vmem:[%s0 + $0xf0] sm:$0xff]
    %v55 = vld [vmem:[%s0 + $0xf8] sm:$0xff]
    %v56 = vld [vmem:[%s0 + $0x100] sm:$0xff]
    %v57 = vld [vmem:[%s0 + $0x108] sm:$0xff]
    %v58 = vld [vmem:[%s0 + $0x110] sm:$0xff]
    %v59 = vld [vmem:[%s0 + $0x118] sm:$0xff]
    %v60 = vld [vmem:[%s0 + $0x120] sm:$0xff]
    %v61 = vld [vmem:[%s0 + $0x128] sm:$0xff]
    %v62 = vld [vmem:[%s0 + $0x130] sm:$0xff]
    %v63 = vld [vmem:[%s0 + $0x138] sm:$0xff]
    %v64 = vld [vmem:[%s0 + $0x140] sm:$0xff]
    %v65 = vld [vmem:[%s0 + $0x148] sm:$0xff]
    %v66 = vld [vmem:[%s0 + $0x150] sm:$0xff]
    %v67 = vld [vmem:[%s0 + $0x158] sm:$0xff]
    %v68 = vld [vmem:[%s0 + $0x160] sm:$0xff]
    %v69 = vld [vmem:[%s0 + $0x168] sm:$0xff]
    %v70 = vld [vmem:[%s0 + $0x170] sm:$0xff]
    %v71 = vld [vmem:[%s0 + $0x178] sm:$0xff]
    %v72 = vld [vmem:[%s5] sm:$0xff]
    %v73 = vld [vmem:[%s5 + $0x8] sm:$0xff]
    %v74 = vld [vmem:[%s5 + $0x10] sm:$0xff]
    %v75 = vld [vmem:[%s5 + $0x18] sm:$0xff]
    %v76 = vld [vmem:[%s5 + $0x20] sm:$0xff]
    %v77 = vld [vmem:[%s5 + $0x28] sm:$0xff]
    %v78 = vld [vmem:[%s5 + $0x30] sm:$0x3f]
    %v79 = vld [vmem:[%s1] sm:$0xff]
    %v80 = vld [vmem:[%s1 + $0x8] sm:$0xff]
    %v81 = vld [vmem:[%s1 + $0x10] sm:$0xff]
    %v82 = vld [vmem:[%s1 + $0x18] sm:$0xff]
    %v83 = vld [vmem:[%s1 + $0x20] sm:$0xff]
    %v84 = vld [vmem:[%s1 + $0x28] sm:$0xff]
    %v85 = vld [vmem:[%s1 + $0x30] sm:$0x3f]
    %87 = vset.pattern.permute.xlu0 0
    %88 = vperm.xlu0 %87, %v72
    %v89 = vpop.permute.xlu0 %88
    %92 = vset.pattern.permute.xlu0 0
    %93 = vperm.xlu0 %92, %v73
    %v94 = vpop.permute.xlu0 %93
    %97 = vset.pattern.permute.xlu0 0
    %98 = vperm.xlu0 %97, %v74
    %v99 = vpop.permute.xlu0 %98
    %102 = vset.pattern.permute.xlu0 0
    %103 = vperm.xlu0 %102, %v75
    %v104 = vpop.permute.xlu0 %103
    %107 = vset.pattern.permute.xlu0 0
    %108 = vperm.xlu0 %107, %v76
    %v109 = vpop.permute.xlu0 %108
    %112 = vset.pattern.permute.xlu0 0
    %113 = vperm.xlu0 %112, %v77
    %v114 = vpop.permute.xlu0 %113
    %117 = vset.pattern.permute.xlu0 0
    %118 = vperm.xlu0 %117, %v78
    %v119 = vpop.permute.xlu0 %118
    %vm121 = vcmask 146432
    %v123 = vsel %vm121, %v79, 0
    %v126 = vsel %vm121, %v80, 0
    %v129 = vsel %vm121, %v81, 0
    %v132 = vsel %vm121, %v82, 0
    %v135 = vsel %vm121, %v83, 0
    %v138 = vsel %vm121, %v84, 0
    %v141 = vsel %vm121, %v85, 0
    %v144 = vsel %vm121, %v24, 0
    %v147 = vsel %vm121, %v25, 0
    %v150 = vsel %vm121, %v26, 0
    %v153 = vsel %vm121, %v27, 0
    %v156 = vsel %vm121, %v28, 0
    %v159 = vsel %vm121, %v29, 0
    %v162 = vsel %vm121, %v30, 0
    %v165 = vsel %vm121, %v31, 0
    %v168 = vsel %vm121, %v32, 0
    %v171 = vsel %vm121, %v33, 0
    %v174 = vsel %vm121, %v34, 0
    %v177 = vsel %vm121, %v35, 0
    %v180 = vsel %vm121, %v36, 0
    %v183 = vsel %vm121, %v37, 0
    %v186 = vsel %vm121, %v38, 0
    %v189 = vsel %vm121, %v39, 0
    %v192 = vsel %vm121, %v40, 0
    %v195 = vsel %vm121, %v41, 0
    %v198 = vsel %vm121, %v42, 0
    %v201 = vsel %vm121, %v43, 0
    %v204 = vsel %vm121, %v44, 0
    %v207 = vsel %vm121, %v45, 0
    %v210 = vsel %vm121, %v46, 0
    %v213 = vsel %vm121, %v47, 0
    %v216 = vsel %vm121, %v48, 0
    %v219 = vsel %vm121, %v49, 0
    %v222 = vsel %vm121, %v50, 0
    %v225 = vsel %vm121, %v51, 0
    %v228 = vsel %vm121, %v52, 0
    %v231 = vsel %vm121, %v53, 0
    %v234 = vsel %vm121, %v54, 0
    %v237 = vsel %vm121, %v55, 0
    %v240 = vsel %vm121, %v56, 0
    %v243 = vsel %vm121, %v57, 0
    %v246 = vsel %vm121, %v58, 0
    %v249 = vsel %vm121, %v59, 0
    %v252 = vsel %vm121, %v60, 0
    %v255 = vsel %vm121, %v61, 0
    %v258 = vsel %vm121, %v62, 0
    %v261 = vsel %vm121, %v63, 0
    %v264 = vsel %vm121, %v64, 0
    %v267 = vsel %vm121, %v65, 0
    %v270 = vsel %vm121, %v66, 0
    %v273 = vsel %vm121, %v67, 0
    %v276 = vsel %vm121, %v68, 0
    %v279 = vsel %vm121, %v69, 0
    %v282 = vsel %vm121, %v70, 0
    %v285 = vsel %vm121, %v71, 0
    %287 = vmatpush.xpose.msra.mxu0 %v189
    %288 = vmatpush.xpose.msra.mxu0 %v186
    %289 = vmatpush.xpose.msra.mxu0 %v183
    %290 = vmatpush.xpose.msra.mxu0 %v180
    %291 = vmatpush.xpose.msra.mxu0 %v177
    %292 = vmatpush.xpose.msra.mxu0 %v174
    %293 = vmatpush.xpose.msra.mxu0 %v171
    %294 = vmatpush.xpose.msra.mxu0 %v168
    %295 = vmatpush.xpose.msra.mxu0 %v165
    %296 = vmatpush.xpose.msra.mxu0 %v162
    %297 = vmatpush.xpose.msra.mxu0 %v159
    %298 = vmatpush.xpose.msra.mxu0 %v156
    %299 = vmatpush.xpose.msra.mxu0 %v153
    %300 = vmatpush.xpose.msra.mxu0 %v150
    %301 = vmatpush.xpose.msra.mxu0 %v147
    %302 = vmatpush.xpose.msra.mxu0 %v144
    %303 = vmatmul.f32.gmra.mxu0 %v123
    %v304 = vpop.f32.mrf.mxu0
    %v305 = vadd.f32 %v89, %v304
    %306 = vmatmul.f32.gmra.mxu0 %v126
    %v307 = vpop.f32.mrf.mxu0
    %v308 = vadd.f32 %v94, %v307
    %309 = vmatmul.f32.gmra.mxu0 %v129
    %v310 = vpop.f32.mrf.mxu0
    %v311 = vadd.f32 %v99, %v310
    %312 = vmatmul.f32.gmra.mxu0 %v132
    %v313 = vpop.f32.mrf.mxu0
    %v314 = vadd.f32 %v104, %v313
    %315 = vmatmul.f32.gmra.mxu0 %v135
    %v316 = vpop.f32.mrf.mxu0
    %v317 = vadd.f32 %v109, %v316
    %318 = vmatmul.f32.gmra.mxu0 %v138
    %v319 = vpop.f32.mrf.mxu0
    %v320 = vadd.f32 %v114, %v319
    %321 = vmatmul.f32.gmra.mxu0 %v141
    %v322 = vpop.f32.mrf.mxu0
    %v323 = vadd.f32 %v119, %v322
    %324 = vdwg.mxu0
    %325 = vmatpush.xpose.msra.mxu0 %v237
    %326 = vmatpush.xpose.msra.mxu0 %v234
    %327 = vmatpush.xpose.msra.mxu0 %v231
    %328 = vmatpush.xpose.msra.mxu0 %v228
    %329 = vmatpush.xpose.msra.mxu0 %v225
    %330 = vmatpush.xpose.msra.mxu0 %v222
    %331 = vmatpush.xpose.msra.mxu0 %v219
    %332 = vmatpush.xpose.msra.mxu0 %v216
    %333 = vmatpush.xpose.msra.mxu0 %v213
    %334 = vmatpush.xpose.msra.mxu0 %v210
    %335 = vmatpush.xpose.msra.mxu0 %v207
    %336 = vmatpush.xpose.msra.mxu0 %v204
    %337 = vmatpush.xpose.msra.mxu0 %v201
    %338 = vmatpush.xpose.msra.mxu0 %v198
    %339 = vmatpush.xpose.msra.mxu0 %v195
    %340 = vmatpush.xpose.msra.mxu0 %v192
    %341 = vmatmul.f32.gmra.mxu0 %v123
    %v342 = vpop.f32.mrf.mxu0
    %v343 = vadd.f32 %v89, %v342
    %344 = vmatmul.f32.gmra.mxu0 %v126
    %v345 = vpop.f32.mrf.mxu0
    %v346 = vadd.f32 %v94, %v345
    %347 = vmatmul.f32.gmra.mxu0 %v129
    %v348 = vpop.f32.mrf.mxu0
    %v349 = vadd.f32 %v99, %v348
    %350 = vmatmul.f32.gmra.mxu0 %v132
    %v351 = vpop.f32.mrf.mxu0
    %v352 = vadd.f32 %v104, %v351
    %353 = vmatmul.f32.gmra.mxu0 %v135
    %v354 = vpop.f32.mrf.mxu0
    %v355 = vadd.f32 %v109, %v354
    %356 = vmatmul.f32.gmra.mxu0 %v138
    %v357 = vpop.f32.mrf.mxu0
    %v358 = vadd.f32 %v114, %v357
    %359 = vmatmul.f32.gmra.mxu0 %v141
    %v360 = vpop.f32.mrf.mxu0
    %v361 = vadd.f32 %v119, %v360
    %362 = vdwg.mxu0
    %363 = vmatpush.xpose.msra.mxu0 %v285
    %364 = vmatpush.xpose.msra.mxu0 %v282
    %365 = vmatpush.xpose.msra.mxu0 %v279
    %366 = vmatpush.xpose.msra.mxu0 %v276
    %367 = vmatpush.xpose.msra.mxu0 %v273
    %368 = vmatpush.xpose.msra.mxu0 %v270
    %369 = vmatpush.xpose.msra.mxu0 %v267
    %370 = vmatpush.xpose.msra.mxu0 %v264
    %371 = vmatpush.xpose.msra.mxu0 %v261
    %372 = vmatpush.xpose.msra.mxu0 %v258
    %373 = vmatpush.xpose.msra.mxu0 %v255
    %374 = vmatpush.xpose.msra.mxu0 %v252
    %375 = vmatpush.xpose.msra.mxu0 %v249
    %376 = vmatpush.xpose.msra.mxu0 %v246
    %377 = vmatpush.xpose.msra.mxu0 %v243
    %378 = vmatpush.xpose.msra.mxu0 %v240
    %379 = vmatmul.f32.gmra.mxu0 %v123
    %v380 = vpop.f32.mrf.mxu0
    %v381 = vadd.f32 %v89, %v380
    %382 = vmatmul.f32.gmra.mxu0 %v126
    %v383 = vpop.f32.mrf.mxu0
    %v384 = vadd.f32 %v94, %v383
    %385 = vmatmul.f32.gmra.mxu0 %v129
    %v386 = vpop.f32.mrf.mxu0
    %v387 = vadd.f32 %v99, %v386
    %388 = vmatmul.f32.gmra.mxu0 %v132
    %v389 = vpop.f32.mrf.mxu0
    %v390 = vadd.f32 %v104, %v389
    %391 = vmatmul.f32.gmra.mxu0 %v135
    %v392 = vpop.f32.mrf.mxu0
    %v393 = vadd.f32 %v109, %v392
    %394 = vmatmul.f32.gmra.mxu0 %v138
    %v395 = vpop.f32.mrf.mxu0
    %v396 = vadd.f32 %v114, %v395
    %397 = vmatmul.f32.gmra.mxu0 %v141
    %v398 = vpop.f32.mrf.mxu0
    %v399 = vadd.f32 %v119, %v398
    %400 = vdwg.mxu0
    %v401 = vmax.f32 %v305, 0.0
    %v402 = vmax.f32 %v343, 0.0
    %v403 = vmax.f32 %v381, 0.0
    %v404 = vmax.f32 %v308, 0.0
    %v405 = vmax.f32 %v346, 0.0
    %v406 = vmax.f32 %v384, 0.0
    %v407 = vmax.f32 %v311, 0.0
    %v408 = vmax.f32 %v349, 0.0
    %v409 = vmax.f32 %v387, 0.0
    %v410 = vmax.f32 %v314, 0.0
    %v411 = vmax.f32 %v352, 0.0
    %v412 = vmax.f32 %v390, 0.0
    %v413 = vmax.f32 %v317, 0.0
    %v414 = vmax.f32 %v355, 0.0
    %v415 = vmax.f32 %v393, 0.0
    %v416 = vmax.f32 %v320, 0.0
    %v417 = vmax.f32 %v358, 0.0
    %v418 = vmax.f32 %v396, 0.0
    %v419 = vmax.f32 %v323, 0.0
    %v420 = vmax.f32 %v361, 0.0
    %v421 = vmax.f32 %v399, 0.0
    %v422 = vld [vmem:[%s2] sm:$0xff]
    %v423 = vld [vmem:[%s2 + $0x8] sm:$0xff]
    %v424 = vld [vmem:[%s2 + $0x10] sm:$0xff]
    %v425 = vld [vmem:[%s2 + $0x18] sm:$0xff]
    %v426 = vld [vmem:[%s2 + $0x20] sm:$0xff]
    %v427 = vld [vmem:[%s2 + $0x28] sm:$0xff]
    %v428 = vld [vmem:[%s2 + $0x30] sm:$0x3f]
    %429 = vset.pattern.permute.xlu0 1
    %430 = vperm.xlu0 %429, %v72
    %v431 = vpop.permute.xlu0 %430
    %433 = vset.pattern.permute.xlu0 1
    %434 = vperm.xlu0 %433, %v73
    %v435 = vpop.permute.xlu0 %434
    %437 = vset.pattern.permute.xlu0 1
    %438 = vperm.xlu0 %437, %v74
    %v439 = vpop.permute.xlu0 %438
    %441 = vset.pattern.permute.xlu0 1
    %442 = vperm.xlu0 %441, %v75
    %v443 = vpop.permute.xlu0 %442
    %445 = vset.pattern.permute.xlu0 1
    %446 = vperm.xlu0 %445, %v76
    %v447 = vpop.permute.xlu0 %446
    %449 = vset.pattern.permute.xlu0 1
    %450 = vperm.xlu0 %449, %v77
    %v451 = vpop.permute.xlu0 %450
    %453 = vset.pattern.permute.xlu0 1
    %454 = vperm.xlu0 %453, %v78
    %v455 = vpop.permute.xlu0 %454
    %vm457 = vcmask 441344
    %v459 = vsel %vm457, %v422, 0
    %v462 = vsel %vm457, %v423, 0
    %v465 = vsel %vm457, %v424, 0
    %v468 = vsel %vm457, %v425, 0
    %v471 = vsel %vm457, %v426, 0
    %v474 = vsel %vm457, %v427, 0
    %v477 = vsel %vm457, %v428, 0
    %vm479 = vcmask 1045504
    %v481 = vsel %vm479, %v419, 0
    %v484 = vsel %vm479, %v420, 0
    %v487 = vsel %vm479, %v421, 0
    %489 = vmatpush.msra.mxu0 0.0
    %490 = vmatpush.msra.mxu0 0.0
    %491 = vmatpush.msra.mxu0 0.0
    %492 = vmatpush.msra.mxu0 0.0
    %493 = vmatpush.msra.mxu0 0.0
    %494 = vmatpush.msra.mxu0 0.0
    %495 = vmatpush.msra.mxu0 0.0
    %496 = vmatpush.msra.mxu0 0.0
    %497 = vmatpush.msra.mxu0 0.0
    %498 = vmatpush.msra.mxu0 %v481
    %499 = vmatpush.msra.mxu0 %v416
    %500 = vmatpush.msra.mxu0 %v413
    %501 = vmatpush.msra.mxu0 %v410
    %502 = vmatpush.msra.mxu0 %v407
    %503 = vmatpush.msra.mxu0 %v404
    %504 = vmatpush.msra.mxu0 %v401
    %505 = vmatmul.f32.gmra.mxu0 %v459
    %v506 = vpop.f32.mrf.mxu0
    %v507 = vadd.f32 %v431, %v506
    %508 = vmatmul.f32.gmra.mxu0 %v462
    %v509 = vpop.f32.mrf.mxu0
    %v510 = vadd.f32 %v435, %v509
    %511 = vmatmul.f32.gmra.mxu0 %v465
    %v512 = vpop.f32.mrf.mxu0
    %v513 = vadd.f32 %v439, %v512
    %514 = vmatmul.f32.gmra.mxu0 %v468
    %v515 = vpop.f32.mrf.mxu0
    %v516 = vadd.f32 %v443, %v515
    %517 = vmatmul.f32.gmra.mxu0 %v471
    %v518 = vpop.f32.mrf.mxu0
    %v519 = vadd.f32 %v447, %v518
    %520 = vmatmul.f32.gmra.mxu0 %v474
    %v521 = vpop.f32.mrf.mxu0
    %v522 = vadd.f32 %v451, %v521
    %523 = vmatmul.f32.gmra.mxu0 %v477
    %v524 = vpop.f32.mrf.mxu0
    %v525 = vadd.f32 %v455, %v524
    %526 = vdwg.mxu0
    %527 = vmatpush.msra.mxu0 0.0
    %528 = vmatpush.msra.mxu0 0.0
    %529 = vmatpush.msra.mxu0 0.0
    %530 = vmatpush.msra.mxu0 0.0
    %531 = vmatpush.msra.mxu0 0.0
    %532 = vmatpush.msra.mxu0 0.0
    %533 = vmatpush.msra.mxu0 0.0
    %534 = vmatpush.msra.mxu0 0.0
    %535 = vmatpush.msra.mxu0 0.0
    %536 = vmatpush.msra.mxu0 %v484
    %537 = vmatpush.msra.mxu0 %v417
    %538 = vmatpush.msra.mxu0 %v414
    %539 = vmatpush.msra.mxu0 %v411
    %540 = vmatpush.msra.mxu0 %v408
    %541 = vmatpush.msra.mxu0 %v405
    %542 = vmatpush.msra.mxu0 %v402
    %543 = vmatmul.f32.gmra.mxu0 %v459
    %v544 = vpop.f32.mrf.mxu0
    %v545 = vadd.f32 %v431, %v544
    %546 = vmatmul.f32.gmra.mxu0 %v462
    %v547 = vpop.f32.mrf.mxu0
    %v548 = vadd.f32 %v435, %v547
    %549 = vmatmul.f32.gmra.mxu0 %v465
    %v550 = vpop.f32.mrf.mxu0
    %v551 = vadd.f32 %v439, %v550
    %552 = vmatmul.f32.gmra.mxu0 %v468
    %v553 = vpop.f32.mrf.mxu0
    %v554 = vadd.f32 %v443, %v553
    %555 = vmatmul.f32.gmra.mxu0 %v471
    %v556 = vpop.f32.mrf.mxu0
    %v557 = vadd.f32 %v447, %v556
    %558 = vmatmul.f32.gmra.mxu0 %v474
    %v559 = vpop.f32.mrf.mxu0
    %v560 = vadd.f32 %v451, %v559
    %561 = vmatmul.f32.gmra.mxu0 %v477
    %v562 = vpop.f32.mrf.mxu0
    %v563 = vadd.f32 %v455, %v562
    %564 = vdwg.mxu0
    %565 = vmatpush.msra.mxu0 0.0
    %566 = vmatpush.msra.mxu0 0.0
    %567 = vmatpush.msra.mxu0 0.0
    %568 = vmatpush.msra.mxu0 0.0
    %569 = vmatpush.msra.mxu0 0.0
    %570 = vmatpush.msra.mxu0 0.0
    %571 = vmatpush.msra.mxu0 0.0
    %572 = vmatpush.msra.mxu0 0.0
    %573 = vmatpush.msra.mxu0 0.0
    %574 = vmatpush.msra.mxu0 %v487
    %575 = vmatpush.msra.mxu0 %v418
    %576 = vmatpush.msra.mxu0 %v415
    %577 = vmatpush.msra.mxu0 %v412
    %578 = vmatpush.msra.mxu0 %v409
    %579 = vmatpush.msra.mxu0 %v406
    %580 = vmatpush.msra.mxu0 %v403
    %581 = vmatmul.f32.gmra.mxu0 %v459
    %v582 = vpop.f32.mrf.mxu0
    %v583 = vadd.f32 %v431, %v582
    %584 = vmatmul.f32.gmra.mxu0 %v462
    %v585 = vpop.f32.mrf.mxu0
    %v586 = vadd.f32 %v435, %v585
    %587 = vmatmul.f32.gmra.mxu0 %v465
    %v588 = vpop.f32.mrf.mxu0
    %v589 = vadd.f32 %v439, %v588
    %590 = vmatmul.f32.gmra.mxu0 %v468
    %v591 = vpop.f32.mrf.mxu0
    %v592 = vadd.f32 %v443, %v591
    %593 = vmatmul.f32.gmra.mxu0 %v471
    %v594 = vpop.f32.mrf.mxu0
    %v595 = vadd.f32 %v447, %v594
    %596 = vmatmul.f32.gmra.mxu0 %v474
    %v597 = vpop.f32.mrf.mxu0
    %v598 = vadd.f32 %v451, %v597
    %599 = vmatmul.f32.gmra.mxu0 %v477
    %v600 = vpop.f32.mrf.mxu0
    %v601 = vadd.f32 %v455, %v600
    %602 = vdwg.mxu0
    %v603 = vmax.f32 %v507, 0.0
    %v604 = vmax.f32 %v545, 0.0
    %v605 = vmax.f32 %v583, 0.0
    %v606 = vmax.f32 %v510, 0.0
    %v607 = vmax.f32 %v548, 0.0
    %v608 = vmax.f32 %v586, 0.0
    %v609 = vmax.f32 %v513, 0.0
    %v610 = vmax.f32 %v551, 0.0
    %v611 = vmax.f32 %v589, 0.0
    %v612 = vmax.f32 %v516, 0.0
    %v613 = vmax.f32 %v554, 0.0
    %v614 = vmax.f32 %v592, 0.0
    %v615 = vmax.f32 %v519, 0.0
    %v616 = vmax.f32 %v557, 0.0
    %v617 = vmax.f32 %v595, 0.0
    %v618 = vmax.f32 %v522, 0.0
    %v619 = vmax.f32 %v560, 0.0
    %v620 = vmax.f32 %v598, 0.0
    %v621 = vmax.f32 %v525, 0.0
    %v622 = vmax.f32 %v563, 0.0
    %v623 = vmax.f32 %v601, 0.0
    %v624 = vld [vmem:[%s3] sm:$0xff]
    %v625 = vld [vmem:[%s3 + $0x8] sm:$0xff]
    %v626 = vld [vmem:[%s3 + $0x10] sm:$0xff]
    %v627 = vld [vmem:[%s3 + $0x18] sm:$0x7]
    %628 = vset.pattern.permute.xlu0 2
    %629 = vperm.xlu0 %628, %v72
    %v630 = vpop.permute.xlu0 %629
    %632 = vset.pattern.permute.xlu0 2
    %633 = vperm.xlu0 %632, %v73
    %v634 = vpop.permute.xlu0 %633
    %636 = vset.pattern.permute.xlu0 2
    %637 = vperm.xlu0 %636, %v74
    %v638 = vpop.permute.xlu0 %637
    %640 = vset.pattern.permute.xlu0 2
    %641 = vperm.xlu0 %640, %v75
    %v642 = vpop.permute.xlu0 %641
    %v645 = vsel %vm457, %v624, 0
    %v648 = vsel %vm457, %v625, 0
    %v651 = vsel %vm457, %v626, 0
    %v654 = vsel %vm457, %v627, 0
    %v657 = vsel %vm479, %v621, 0
    %v660 = vsel %vm479, %v622, 0
    %v663 = vsel %vm479, %v623, 0
    %665 = vmatpush.msra.mxu0 0.0
    %666 = vmatpush.msra.mxu0 0.0
    %667 = vmatpush.msra.mxu0 0.0
    %668 = vmatpush.msra.mxu0 0.0
    %669 = vmatpush.msra.mxu0 0.0
    %670 = vmatpush.msra.mxu0 0.0
    %671 = vmatpush.msra.mxu0 0.0
    %672 = vmatpush.msra.mxu0 0.0
    %673 = vmatpush.msra.mxu0 0.0
    %674 = vmatpush.msra.mxu0 %v657
    %675 = vmatpush.msra.mxu0 %v618
    %676 = vmatpush.msra.mxu0 %v615
    %677 = vmatpush.msra.mxu0 %v612
    %678 = vmatpush.msra.mxu0 %v609
    %679 = vmatpush.msra.mxu0 %v606
    %680 = vmatpush.msra.mxu0 %v603
    %681 = vmatmul.f32.gmra.mxu0 %v645
    %v682 = vpop.f32.mrf.mxu0
    %v683 = vadd.f32 %v630, %v682
    %684 = vmatmul.f32.gmra.mxu0 %v648
    %v685 = vpop.f32.mrf.mxu0
    %v686 = vadd.f32 %v634, %v685
    %687 = vmatmul.f32.gmra.mxu0 %v651
    %v688 = vpop.f32.mrf.mxu0
    %v689 = vadd.f32 %v638, %v688
    %690 = vmatmul.f32.gmra.mxu0 %v654
    %v691 = vpop.f32.mrf.mxu0
    %v692 = vadd.f32 %v642, %v691
    %693 = vdwg.mxu0
    %694 = vmatpush.msra.mxu0 0.0
    %695 = vmatpush.msra.mxu0 0.0
    %696 = vmatpush.msra.mxu0 0.0
    %697 = vmatpush.msra.mxu0 0.0
    %698 = vmatpush.msra.mxu0 0.0
    %699 = vmatpush.msra.mxu0 0.0
    %700 = vmatpush.msra.mxu0 0.0
    %701 = vmatpush.msra.mxu0 0.0
    %702 = vmatpush.msra.mxu0 0.0
    %703 = vmatpush.msra.mxu0 %v660
    %704 = vmatpush.msra.mxu0 %v619
    %705 = vmatpush.msra.mxu0 %v616
    %706 = vmatpush.msra.mxu0 %v613
    %707 = vmatpush.msra.mxu0 %v610
    %708 = vmatpush.msra.mxu0 %v607
    %709 = vmatpush.msra.mxu0 %v604
    %710 = vmatmul.f32.gmra.mxu0 %v645
    %v711 = vpop.f32.mrf.mxu0
    %v712 = vadd.f32 %v630, %v711
    %713 = vmatmul.f32.gmra.mxu0 %v648
    %v714 = vpop.f32.mrf.mxu0
    %v715 = vadd.f32 %v634, %v714
    %716 = vmatmul.f32.gmra.mxu0 %v651
    %v717 = vpop.f32.mrf.mxu0
    %v718 = vadd.f32 %v638, %v717
    %719 = vmatmul.f32.gmra.mxu0 %v654
    %v720 = vpop.f32.mrf.mxu0
    %v721 = vadd.f32 %v642, %v720
    %722 = vdwg.mxu0
    %723 = vmatpush.msra.mxu0 0.0
    %724 = vmatpush.msra.mxu0 0.0
    %725 = vmatpush.msra.mxu0 0.0
    %726 = vmatpush.msra.mxu0 0.0
    %727 = vmatpush.msra.mxu0 0.0
    %728 = vmatpush.msra.mxu0 0.0
    %729 = vmatpush.msra.mxu0 0.0
    %730 = vmatpush.msra.mxu0 0.0
    %731 = vmatpush.msra.mxu0 0.0
    %732 = vmatpush.msra.mxu0 %v663
    %733 = vmatpush.msra.mxu0 %v620
    %734 = vmatpush.msra.mxu0 %v617
    %735 = vmatpush.msra.mxu0 %v614
    %736 = vmatpush.msra.mxu0 %v611
    %737 = vmatpush.msra.mxu0 %v608
    %738 = vmatpush.msra.mxu0 %v605
    %739 = vmatmul.f32.gmra.mxu0 %v645
    %v740 = vpop.f32.mrf.mxu0
    %v741 = vadd.f32 %v630, %v740
    %742 = vmatmul.f32.gmra.mxu0 %v648
    %v743 = vpop.f32.mrf.mxu0
    %v744 = vadd.f32 %v634, %v743
    %745 = vmatmul.f32.gmra.mxu0 %v651
    %v746 = vpop.f32.mrf.mxu0
    %v747 = vadd.f32 %v638, %v746
    %748 = vmatmul.f32.gmra.mxu0 %v654
    %v749 = vpop.f32.mrf.mxu0
    %v750 = vadd.f32 %v642, %v749
    %751 = vdwg.mxu0
    %v752 = vmax.f32 %v683, 0.0
    %v753 = vmax.f32 %v712, 0.0
    %v754 = vmax.f32 %v741, 0.0
    %v755 = vmax.f32 %v686, 0.0
    %v756 = vmax.f32 %v715, 0.0
    %v757 = vmax.f32 %v744, 0.0
    %v758 = vmax.f32 %v689, 0.0
    %v759 = vmax.f32 %v718, 0.0
    %v760 = vmax.f32 %v747, 0.0
    %v761 = vmax.f32 %v692, 0.0
    %v762 = vmax.f32 %v721, 0.0
    %v763 = vmax.f32 %v750, 0.0
    %v764 = vld [vmem:[%s4] sm:$0xff]
    %v765 = vld [vmem:[%s4 + $0x8] sm:$0x1]
    %766 = vset.pattern.permute.xlu0 3
    %767 = vperm.xlu0 %766, %v72
    %v768 = vpop.permute.xlu0 %767
    %770 = vset.pattern.permute.xlu0 3
    %771 = vperm.xlu0 %770, %v73
    %v772 = vpop.permute.xlu0 %771
    %vm774 = vcmask 220160
    %v776 = vsel %vm774, %v764, 0
    %v779 = vsel %vm774, %v765, 0
    %vm781 = vcmask 1042432
    %v783 = vsel %vm781, %v761, 0
    %v786 = vsel %vm781, %v762, 0
    %v789 = vsel %vm781, %v763, 0
    %791 = vmatpush.msra.mxu0 0.0
    %792 = vmatpush.msra.mxu0 0.0
    %793 = vmatpush.msra.mxu0 0.0
    %794 = vmatpush.msra.mxu0 0.0
    %795 = vmatpush.msra.mxu0 0.0
    %796 = vmatpush.msra.mxu0 0.0
    %797 = vmatpush.msra.mxu0 0.0
    %798 = vmatpush.msra.mxu0 0.0
    %799 = vmatpush.msra.mxu0 0.0
    %800 = vmatpush.msra.mxu0 0.0
    %801 = vmatpush.msra.mxu0 0.0
    %802 = vmatpush.msra.mxu0 0.0
    %803 = vmatpush.msra.mxu0 %v783
    %804 = vmatpush.msra.mxu0 %v758
    %805 = vmatpush.msra.mxu0 %v755
    %806 = vmatpush.msra.mxu0 %v752
    %807 = vmatmul.f32.gmra.mxu0 %v776
    %v808 = vpop.f32.mrf.mxu0
    %v809 = vadd.f32 %v768, %v808
    %810 = vmatmul.f32.gmra.mxu0 %v779
    %v811 = vpop.f32.mrf.mxu0
    %v812 = vadd.f32 %v772, %v811
    %813 = vdwg.mxu0
    %814 = vmatpush.msra.mxu0 0.0
    %815 = vmatpush.msra.mxu0 0.0
    %816 = vmatpush.msra.mxu0 0.0
    %817 = vmatpush.msra.mxu0 0.0
    %818 = vmatpush.msra.mxu0 0.0
    %819 = vmatpush.msra.mxu0 0.0
    %820 = vmatpush.msra.mxu0 0.0
    %821 = vmatpush.msra.mxu0 0.0
    %822 = vmatpush.msra.mxu0 0.0
    %823 = vmatpush.msra.mxu0 0.0
    %824 = vmatpush.msra.mxu0 0.0
    %825 = vmatpush.msra.mxu0 0.0
    %826 = vmatpush.msra.mxu0 %v786
    %827 = vmatpush.msra.mxu0 %v759
    %828 = vmatpush.msra.mxu0 %v756
    %829 = vmatpush.msra.mxu0 %v753
    %830 = vmatmul.f32.gmra.mxu0 %v776
    %v831 = vpop.f32.mrf.mxu0
    %v832 = vadd.f32 %v768, %v831
    %833 = vmatmul.f32.gmra.mxu0 %v779
    %v834 = vpop.f32.mrf.mxu0
    %v835 = vadd.f32 %v772, %v834
    %836 = vdwg.mxu0
    %837 = vmatpush.msra.mxu0 0.0
    %838 = vmatpush.msra.mxu0 0.0
    %839 = vmatpush.msra.mxu0 0.0
    %840 = vmatpush.msra.mxu0 0.0
    %841 = vmatpush.msra.mxu0 0.0
    %842 = vmatpush.msra.mxu0 0.0
    %843 = vmatpush.msra.mxu0 0.0
    %844 = vmatpush.msra.mxu0 0.0
    %845 = vmatpush.msra.mxu0 0.0
    %846 = vmatpush.msra.mxu0 0.0
    %847 = vmatpush.msra.mxu0 0.0
    %848 = vmatpush.msra.mxu0 0.0
    %849 = vmatpush.msra.mxu0 %v789
    %850 = vmatpush.msra.mxu0 %v760
    %851 = vmatpush.msra.mxu0 %v757
    %852 = vmatpush.msra.mxu0 %v754
    %853 = vmatmul.f32.gmra.mxu0 %v776
    %v854 = vpop.f32.mrf.mxu0
    %v855 = vadd.f32 %v768, %v854
    %856 = vmatmul.f32.gmra.mxu0 %v779
    %v857 = vpop.f32.mrf.mxu0
    %v858 = vadd.f32 %v772, %v857
    %859 = vdwg.mxu0
    %v860 = vtanh.pop %v809
    %v861 = vtanh.pop %v832
    %v862 = vtanh.pop %v855
    %v863 = vtanh.pop %v812
    %v864 = vtanh.pop %v835
    %v865 = vtanh.pop %v858
    %866 = vst [vmem:[#allocation2] sm:$0xff] %v860
    %867 = vst [vmem:[#allocation2 + $0x8] sm:$0xff] %v861
    %868 = vst [vmem:[#allocation2 + $0x10] sm:$0xff] %v862
    %869 = vst [vmem:[#allocation2 + $0x18] sm:$0x1] %v863
    %870 = vst [vmem:[#allocation2 + $0x20] sm:$0x1] %v864
    %871 = vst [vmem:[#allocation2 + $0x28] sm:$0x1] %v865
    // Predicated region
    $region26: #{network_forward.1} parent=1 // pred_check
      _
    $region27: #{network_forward.1} parent=1 // pred_check_branch
      %873 = sbr.rel (0) target = $region29
    $region28: #{network_forward.1} parent=1 // pred_region
      %875 = vsyncadd [#allocation3], 0
      %s876 = sshll.u32 [#allocation2], 4
      %s877 = int_to_ptr.vmem [resolvable:$true] %s876
      %s878 = sshll.u32 %s6, 4
      %s879 = int_to_ptr.hbm [resolvable:$true] %s878
      %884 = dma.vmem_to_hbm [thread:$0]  %s877, 768, %s879, [#allocation3], 384, 384, 24
    $region29: #{network_forward.1} parent=1 // pred_fallthru
      _
    // Predicated region
    $region30: #{network_forward.1} parent=1 // pred_check
      _
    $region31: #{network_forward.1} parent=1 // pred_check_branch
      %886 = sbr.rel (0) target = $region33
    $region32: #{network_forward.1} parent=1 // pred_region
      %888 = dma.done [#allocation3], 768
    $region33: #{network_forward.1} parent=1 // pred_fallthru
      _
    %889 = vsyncpa [#allocation3], 1

</llo_original>
